<compile_context>
chip_gen: v7x
topology: tpu7x:2x2x1
jax: 0.10.0
libtpu: 0.0.40
codegen_flags: <defaults>
</compile_context>

<pallas_src>
import math

import jax
import jax.numpy as jnp
from jax.experimental import pallas as pl
from jax.experimental.pallas import tpu as pltpu


def _round_up(x, m):
    return (x + m - 1) // m * m


def _round_down(x, m):
    return (x // m) * m


def _sublane(dtype):
    """Native sublane tile for a dtype: 8 (f32), 16 (bf16), 32 (int8/fp8)."""
    return max(8, 32 // jnp.dtype(dtype).itemsize)


def _vmem_capacity_bytes():
    try:
        return int(pltpu.get_tpu_info().vmem_capacity_bytes)
    except Exception:
        return 64 * 1024 * 1024  # conservative default (v7x per-core VMEM)


def _sigmoid_gate_kernel(x_ref, v_ref, o_ref, acc_ref):
    kk = pl.program_id(1)

    @pl.when(kk == 0)
    def _():
        acc_ref[...] = jnp.zeros_like(acc_ref)

    # (tm, tk) @ (tk, n) -> (tm, n) on the MXU with f32 accumulation. The
    # weight was pre-transposed in the wrapper, so the rhs is already K-rows /
    # N-lanes (no in-kernel relayout of the resident / streamed tile).
    # NOTE: default MXU precision; the gate does not need bit parity with a
    # torch f32 matmul.
    acc_ref[...] += jax.lax.dot_general(
        x_ref[...],
        v_ref[...],
        dimension_numbers=(((1,), (0,)), ((), ())),
        preferred_element_type=jnp.float32,
    )

    @pl.when(kk == pl.num_programs(1) - 1)
    def _():
        o_ref[...] = jax.nn.sigmoid(acc_ref[...]).astype(o_ref.dtype)


def sigmoid_gate(x, v, *, row_tile=None, k_tile=None, vmem_budget_frac=0.4):
    """sigmoid(x @ v.T), matching torch.sigmoid(F.linear(x, v, bias=None))."""
    k = x.shape[-1]
    n = v.shape[0]
    assert v.shape == (n, k), f"weight shape {v.shape} != ({n}, {k})"

    out_dtype = x.dtype
    leading = x.shape[:-1]
    m = math.prod(leading) if leading else 1

    x_flat = x.reshape(m, k)        # no M padding: ragged last block is fine
    v_t = jnp.transpose(v)          # (K, N): MXU-stationary layout, one-time

    x_item = jnp.dtype(x.dtype).itemsize
    v_item = jnp.dtype(v.dtype).itemsize
    o_item = jnp.dtype(out_dtype).itemsize
    sub = _sublane(x.dtype)

    capacity = _vmem_capacity_bytes()
    budget = int(capacity * vmem_budget_frac)
    w_budget = budget // 2

    # ---- K tiling: resident weight if it fits, else K-split with accumulator.
    if k_tile is not None:
        tk = min(int(k_tile), k)
    elif k * n * v_item <= w_budget:
        tk = k
    else:
        tk = _round_down(max(w_budget // (2 * n * v_item), 128), 128)
        tk = max(128, min(tk, 8 * 1024, _round_up(k, 128)))

    if tk >= k:
        tk = k
        grid_k = 1
        w_bufs = 1                   # constant index map -> Buffered(1)
    else:
        grid_k = pl.cdiv(k, tk)
        w_bufs = 2                   # streamed weight tiles, double-buffered
        if k % tk:
            # Zero-pad K so partial K blocks never feed garbage into the
            # accumulator (zeros are a no-op for the dot). Only hit for very
            # large input_dim, never for the common resident-weight path.
            k_pad = _round_up(k, tk)
            x_flat = jnp.pad(x_flat, ((0, 0), (0, k_pad - k)))
            v_t = jnp.pad(v_t, ((0, k_pad - k), (0, 0)))
            k = k_pad
    w_bytes = w_bufs * tk * n * v_item

    # ---- M tiling from the remaining VMEM budget (dtype-aware sublane).
    per_row = 2 * tk * x_item + 2 * n * o_item + n * 4   # x(2x) + out(2x) + acc
    tm = (budget - w_bytes) // max(per_row, 1)
    tm = max(sub, min(int(tm), 2048))
    # Keep >= ~4 grid steps on the parallel M axis so both v7x TensorCores get
    # work and the x DMA stays overlapped with compute.
    tm = min(tm, max(sub, _round_up(pl.cdiv(m, 4), sub)))
    if row_tile is not None:
        tm = int(row_tile)
    if tm >= m:
        tm = m                       # full-dim block is always legal
    else:
        tm = max(sub, _round_down(tm, sub))
    grid_m = pl.cdiv(m, tm)

    # ---- VMEM limit: actual footprint + ~25% headroom (+ slack for the
    # double-buffered-weight fallback below).
    footprint = (2 * tm * tk * x_item
                 + w_bytes
                 + 2 * tm * n * o_item
                 + tm * n * 4)
    limit_base = footprint + (tk * n * v_item if w_bufs == 1 else 0)
    if limit_base > int(capacity * 0.9):
        raise ValueError(
            f"sigmoid_gate tiling does not fit VMEM (needs ~{limit_base} B of "
            f"{capacity} B); output_dim={n} too large — an N-split is needed.")
    vmem_limit = int(min(max(limit_base + limit_base // 4, 4 * 1024 * 1024),
                         int(capacity * 0.9)))

    def _make_call(single_buffer_weight):
        w_kwargs = ({"pipeline_mode": pl.Buffered(1)}
                    if single_buffer_weight else {})
        return pl.pallas_call(
            _sigmoid_gate_kernel,
            out_shape=jax.ShapeDtypeStruct((m, n), out_dtype),
            grid_spec=pltpu.PrefetchScalarGridSpec(
                num_scalar_prefetch=0,
                grid=(grid_m, grid_k),
                in_specs=[
                    # x rows: tiled over M, streamed over K.
                    pl.BlockSpec((tm, tk), lambda i, kk: (i, kk)),
                    # weight: resident (grid_k == 1) or streamed over K.
                    pl.BlockSpec((tk, n), lambda i, kk: (kk, 0), **w_kwargs),
                ],
                # Unpadded (tm, n) output block: no 128-wide inflation for the
                # module's N=1 gate, no wrapper-side slice pass.
                out_specs=pl.BlockSpec((tm, n), lambda i, kk: (i, 0)),
                scratch_shapes=[pltpu.VMEM((tm, n), jnp.float32)],
            ),
            compiler_params=pltpu.CompilerParams(
                dimension_semantics=("parallel", "arbitrary"),
                vmem_limit_bytes=vmem_limit,
            ),
        )

    if grid_k == 1:
        try:
            out_flat = _make_call(True)(x_flat, v_t)
        except Exception:
            # pipeline_mode=pl.Buffered(1) not accepted by this jax version:
            # fall back to the default double-buffered resident weight.
            out_flat = _make_call(False)(x_flat, v_t)
    else:
        out_flat = _make_call(False)(x_flat, v_t)

    return out_flat.reshape(*leading, n)


if __name__ == "__main__":
    key = jax.random.PRNGKey(0)
    k_x, k_v, k_x2, k_v2, k_x3, k_v3 = jax.random.split(key, 6)

    # --- Case 1: the module's canonical shape (gate over hidden, N=1) -------
    batch, seq, hidden = 2, 8, 32
    output_dim = 1
    x = jax.random.normal(k_x, (batch, seq, hidden), dtype=jnp.float32)
    # Random weight so the matmul path is exercised (module init is zeros).
    v = 0.1 * jax.random.normal(k_v, (output_dim, hidden), dtype=jnp.float32)

    out = jax.block_until_ready(sigmoid_gate(x, v))
    ref = jax.nn.sigmoid(
        jnp.einsum("bsk,nk->bsn", x, v, precision=jax.lax.Precision.HIGHEST))
    assert out.shape == (batch, seq, output_dim)
    assert jnp.allclose(out, ref, atol=1e-5, rtol=1e-5), "mismatch (case 1)"

    # Module's default zero-init weight -> every gate output is exactly 0.5.
    out_zero = jax.block_until_ready(
        sigmoid_gate(x, jnp.zeros((output_dim, hidden), jnp.float32)))
    assert jnp.allclose(out_zero, 0.5, atol=1e-6), "zero-init mismatch"

    # --- Case 2: ragged M tiling (grid_m=3, partial last block) and N > 1 ---
    x2 = jax.random.normal(k_x2, (5, 8, hidden), dtype=jnp.float32)   # M = 40
    v2 = 0.1 * jax.random.normal(k_v2, (3, hidden), dtype=jnp.float32)
    out2 = jax.block_until_ready(sigmoid_gate(x2, v2, row_tile=16))
    ref2 = jax.nn.sigmoid(
        jnp.einsum("bsk,nk->bsn", x2, v2, precision=jax.lax.Precision.HIGHEST))
    assert out2.shape == (5, 8, 3)
    assert jnp.allclose(out2, ref2, atol=1e-5, rtol=1e-5), "mismatch (case 2)"

    # --- Case 3: force the K-split accumulator path (grid_k=2) --------------
    x3 = jax.random.normal(k_x3, (2, 8, 256), dtype=jnp.float32)
    v3 = 0.1 * jax.random.normal(k_v3, (2, 256), dtype=jnp.float32)
    out3 = jax.block_until_ready(sigmoid_gate(x3, v3, k_tile=128))
    ref3 = jax.nn.sigmoid(
        jnp.einsum("bsk,nk->bsn", x3, v3, precision=jax.lax.Precision.HIGHEST))
    assert out3.shape == (2, 8, 2)
    assert jnp.allclose(out3, ref3, atol=1e-5, rtol=1e-5), "mismatch (case 3)"

    print("KERNEL_OK")
</pallas_src>

<mosaic_0001>
module attributes {stable_mosaic.version = 11 : i64} {
  func.func @_sigmoid_gate_kernel(%arg0: i32, %arg1: i32, %arg2: memref<8x32xf32, #tpu.memory_space<vmem>>, %arg3: memref<32x1xf32, #tpu.memory_space<vmem>>, %arg4: memref<8x1xf32, #tpu.memory_space<vmem>>, %arg5: memref<8x1xf32, #tpu.memory_space<vmem>>) attributes {dimension_semantics = [#tpu.dimension_semantics<parallel>, #tpu.dimension_semantics<arbitrary>], iteration_bounds = array<i64: 2, 1>, scalar_prefetch = 0 : i64, scratch_operands = 1 : i64, tpu.core_type = #tpu.core_type<tc>, window_params = [{transform_indices = @transform_0, window_bounds = array<i64: 8, 32>}, {pipeline_mode = #tpu.pipeline_mode<synchronous>, transform_indices = @transform_1, window_bounds = array<i64: 32, 1>}, {transform_indices = @transform_2, window_bounds = array<i64: 8, 1>}]} {
    %c0_i32 = arith.constant 0 : i32
    %0 = arith.cmpi eq, %arg1, %c0_i32 : i32
    %1 = arith.extui %0 : i1 to i32
    %c0_i32_0 = arith.constant 0 : i32
    %2 = arith.cmpi ne, %1, %c0_i32_0 : i32
    scf.if %2 {
      %cst_10 = arith.constant 0.000000e+00 : f32
      %12 = vector.broadcast %cst_10 : f32 to vector<8x1xf32>
      %c0_11 = arith.constant 0 : index
      %c0_12 = arith.constant 0 : index
      %13 = vector.load %arg5[%c0_11, %c0_12] : memref<8x1xf32, #tpu.memory_space<vmem>>, vector<8x1xf32>
      tpu.vector_store %arg5[%c0_11, %c0_12], %12 {strides = array<i32>} : memref<8x1xf32, #tpu.memory_space<vmem>>, vector<8x1xf32>,
    } else {
    }
    %c0 = arith.constant 0 : index
    %c0_1 = arith.constant 0 : index
    %3 = vector.load %arg5[%c0, %c0_1] : memref<8x1xf32, #tpu.memory_space<vmem>>, vector<8x1xf32>
    %c0_2 = arith.constant 0 : index
    %c0_3 = arith.constant 0 : index
    %4 = vector.load %arg2[%c0_2, %c0_3] : memref<8x32xf32, #tpu.memory_space<vmem>>, vector<8x32xf32>
    %c0_4 = arith.constant 0 : index
    %c0_5 = arith.constant 0 : index
    %5 = vector.load %arg3[%c0_4, %c0_5] : memref<32x1xf32, #tpu.memory_space<vmem>>, vector<32x1xf32>
    %cst = arith.constant dense<0.000000e+00> : vector<8x1xf32>
    %6 = tpu.matmul %4, %5, %cst {dimension_numbers = #tpu.dot_dimension_numbers<[1], [0], [0], [1], [0, 0, 1, 1], [], []>} : vector<8x32xf32>, vector<32x1xf32>, vector<8x1xf32> -> vector<8x1xf32>
    %7 = arith.addf %3, %6 : vector<8x1xf32>
    %c0_6 = arith.constant 0 : index
    %c0_7 = arith.constant 0 : index
    %8 = vector.load %arg5[%c0_6, %c0_7] : memref<8x1xf32, #tpu.memory_space<vmem>>, vector<8x1xf32>
    tpu.vector_store %arg5[%c0_6, %c0_7], %7 {strides = array<i32>} : memref<8x1xf32, #tpu.memory_space<vmem>>, vector<8x1xf32>,
    %c0_i32_8 = arith.constant 0 : i32
    %9 = arith.cmpi eq, %arg1, %c0_i32_8 : i32
    %10 = arith.extui %9 : i1 to i32
    %c0_i32_9 = arith.constant 0 : i32
    %11 = arith.cmpi ne, %10, %c0_i32_9 : i32
    scf.if %11 {
      %c0_10 = arith.constant 0 : index
      %c0_11 = arith.constant 0 : index
      %12 = vector.load %arg5[%c0_10, %c0_11] : memref<8x1xf32, #tpu.memory_space<vmem>>, vector<8x1xf32>
      %13 = arith.negf %12 : vector<8x1xf32>
      %14 = math.exp %13 : vector<8x1xf32>
      %cst_12 = arith.constant 1.000000e+00 : f32
      %15 = vector.broadcast %cst_12 : f32 to vector<8x1xf32>
      %16 = arith.addf %15, %14 : vector<8x1xf32>
      %17 = arith.divf %15, %16 : vector<8x1xf32>
      %c0_13 = arith.constant 0 : index
      %c0_14 = arith.constant 0 : index
      %18 = vector.load %arg4[%c0_13, %c0_14] : memref<8x1xf32, #tpu.memory_space<vmem>>, vector<8x1xf32>
      tpu.vector_store %arg4[%c0_13, %c0_14], %17 {strides = array<i32>} : memref<8x1xf32, #tpu.memory_space<vmem>>, vector<8x1xf32>,
    } else {
    }
    return
  }
  func.func @transform_0(%arg0: i32, %arg1: i32) -> (i32, i32) {
    %c0_i32 = arith.constant 0 : i32
    return %arg0, %arg1 : i32, i32
  }
  func.func @transform_1(%arg0: i32, %arg1: i32) -> (i32, i32) {
    %c0_i32 = arith.constant 0 : i32
    %c0_i32_0 = arith.constant 0 : i32
    return %arg1, %c0_i32 : i32, i32
  }
  func.func @transform_2(%arg0: i32, %arg1: i32) -> (i32, i32) {
    %c0_i32 = arith.constant 0 : i32
    %c0_i32_0 = arith.constant 0 : i32
    return %arg0, %c0_i32 : i32, i32
  }
}

module attributes {stable_mosaic.version = 11 : i64} {
  func.func @_sigmoid_gate_kernel(%arg0: i32, %arg1: i32, %arg2: memref<8x32xf32, #tpu.memory_space<vmem>>, %arg3: memref<32x1xf32, #tpu.memory_space<vmem>>, %arg4: memref<8x1xf32, #tpu.memory_space<vmem>>, %arg5: memref<8x1xf32, #tpu.memory_space<vmem>>) attributes {dimension_semantics = [#tpu.dimension_semantics<parallel>, #tpu.dimension_semantics<arbitrary>], iteration_bounds = array<i64: 2, 1>, scalar_prefetch = 0 : i64, scratch_operands = 1 : i64, tpu.core_type = #tpu.core_type<tc>, window_params = [{transform_indices = @transform_0, window_bounds = array<i64: 8, 32>}, {transform_indices = @transform_1, window_bounds = array<i64: 32, 1>}, {transform_indices = @transform_2, window_bounds = array<i64: 8, 1>}]} {
    %c0_i32 = arith.constant 0 : i32
    %0 = arith.cmpi eq, %arg1, %c0_i32 : i32
    %1 = arith.extui %0 : i1 to i32
    %c0_i32_0 = arith.constant 0 : i32
    %2 = arith.cmpi ne, %1, %c0_i32_0 : i32
    scf.if %2 {
      %cst_10 = arith.constant 0.000000e+00 : f32
      %12 = vector.broadcast %cst_10 : f32 to vector<8x1xf32>
      %c0_11 = arith.constant 0 : index
      %c0_12 = arith.constant 0 : index
      %13 = vector.load %arg5[%c0_11, %c0_12] : memref<8x1xf32, #tpu.memory_space<vmem>>, vector<8x1xf32>
      tpu.vector_store %arg5[%c0_11, %c0_12], %12 {strides = array<i32>} : memref<8x1xf32, #tpu.memory_space<vmem>>, vector<8x1xf32>,
    } else {
    }
    %c0 = arith.constant 0 : index
    %c0_1 = arith.constant 0 : index
    %3 = vector.load %arg5[%c0, %c0_1] : memref<8x1xf32, #tpu.memory_space<vmem>>, vector<8x1xf32>
    %c0_2 = arith.constant 0 : index
    %c0_3 = arith.constant 0 : index
    %4 = vector.load %arg2[%c0_2, %c0_3] : memref<8x32xf32, #tpu.memory_space<vmem>>, vector<8x32xf32>
    %c0_4 = arith.constant 0 : index
    %c0_5 = arith.constant 0 : index
    %5 = vector.load %arg3[%c0_4, %c0_5] : memref<32x1xf32, #tpu.memory_space<vmem>>, vector<32x1xf32>
    %cst = arith.constant dense<0.000000e+00> : vector<8x1xf32>
    %6 = tpu.matmul %4, %5, %cst {dimension_numbers = #tpu.dot_dimension_numbers<[1], [0], [0], [1], [0, 0, 1, 1], [], []>} : vector<8x32xf32>, vector<32x1xf32>, vector<8x1xf32> -> vector<8x1xf32>
    %7 = arith.addf %3, %6 : vector<8x1xf32>
    %c0_6 = arith.constant 0 : index
    %c0_7 = arith.constant 0 : index
    %8 = vector.load %arg5[%c0_6, %c0_7] : memref<8x1xf32, #tpu.memory_space<vmem>>, vector<8x1xf32>
    tpu.vector_store %arg5[%c0_6, %c0_7], %7 {strides = array<i32>} : memref<8x1xf32, #tpu.memory_space<vmem>>, vector<8x1xf32>,
    %c0_i32_8 = arith.constant 0 : i32
    %9 = arith.cmpi eq, %arg1, %c0_i32_8 : i32
    %10 = arith.extui %9 : i1 to i32
    %c0_i32_9 = arith.constant 0 : i32
    %11 = arith.cmpi ne, %10, %c0_i32_9 : i32
    scf.if %11 {
      %c0_10 = arith.constant 0 : index
      %c0_11 = arith.constant 0 : index
      %12 = vector.load %arg5[%c0_10, %c0_11] : memref<8x1xf32, #tpu.memory_space<vmem>>, vector<8x1xf32>
      %13 = arith.negf %12 : vector<8x1xf32>
      %14 = math.exp %13 : vector<8x1xf32>
      %cst_12 = arith.constant 1.000000e+00 : f32
      %15 = vector.broadcast %cst_12 : f32 to vector<8x1xf32>
      %16 = arith.addf %15, %14 : vector<8x1xf32>
      %17 = arith.divf %15, %16 : vector<8x1xf32>
      %c0_13 = arith.constant 0 : index
      %c0_14 = arith.constant 0 : index
      %18 = vector.load %arg4[%c0_13, %c0_14] : memref<8x1xf32, #tpu.memory_space<vmem>>, vector<8x1xf32>
      tpu.vector_store %arg4[%c0_13, %c0_14], %17 {strides = array<i32>} : memref<8x1xf32, #tpu.memory_space<vmem>>, vector<8x1xf32>,
    } else {
    }
    return
  }
  func.func @transform_0(%arg0: i32, %arg1: i32) -> (i32, i32) {
    %c0_i32 = arith.constant 0 : i32
    return %arg0, %arg1 : i32, i32
  }
  func.func @transform_1(%arg0: i32, %arg1: i32) -> (i32, i32) {
    %c0_i32 = arith.constant 0 : i32
    %c0_i32_0 = arith.constant 0 : i32
    return %arg1, %c0_i32 : i32, i32
  }
  func.func @transform_2(%arg0: i32, %arg1: i32) -> (i32, i32) {
    %c0_i32 = arith.constant 0 : i32
    %c0_i32_0 = arith.constant 0 : i32
    return %arg0, %c0_i32 : i32, i32
  }
}

</mosaic_0001>

<llo_original>
// kernel: tpu_custom_call.1
$region0: #{tpu_custom_call.1}
  #allocation0 [shape = 'u32[]', space=smem, size = 0x4, offset = 0x4, fixed_abs, tag = 'smem constant byte address 0x4 - core index']
  #allocation1 [shape = 'u32[144,128]{1,0:T(1,128)}', space=vmem, size = 0x12000, scoped, tag = 'internal scratch']
  #allocation2 [shape = 'f32[8,1]{1,0:T(8,128)}', space=vmem, size = 0x1000, scoped, tag = 'scratch operand']
  %s0 = inlined_call_operand.vmem [shape: f32[16,32], index: 0, kind: input, shape index: {}]
  %s1 = inlined_call_operand.vmem [shape: f32[32,1], index: 1, kind: input, shape index: {}]
  %s2 = inlined_call_operand.vmem [shape: f32[16,1], index: 2, kind: output, shape index: {}]
  %s3 = sld [smem:[#allocation0]]
  $region49: #{tpu_custom_call.1} parent=0
    _
  %s5 = ssub.s32 1, %s3
  %s6 = scalar_select 0, %s5, %s3
  loop: start=0, step=1, limit=4
  $region2: #{tpu_custom_call.1} parent=0 // loop_pre_header
    _
  $region3: #{tpu_custom_call.1} parent=0 // loop_header
    %s8 = sphi 0, %s12
    %p9 = scmp.ge.s32.totalorder %s8, 4
    %s15 = sphi 0, %s27
    %s16 = sphi 0, %s23
    %s17 = sphi 0, %s15
    %s18 = sphi 0, %s16
    %s19 = sphi 0, %s17
    %s20 = sphi 0, %s18
    %s32 = sphi 0, %s34
    %s35 = sphi 0, %s32
    %s36 = sphi 0, %s35
    %s52 = sphi 0, %s36
    %s58 = sphi 0, %s60
    %s61 = sphi 0, %s58
    %s62 = sphi 0, %s61
    %s78 = sphi 0, %s62
    %s84 = sphi 0, %s86
    %s87 = sphi 0, %s84
    %s88 = sphi 0, %s87
    %s104 = sphi 0, %s88
  $region4: #{tpu_custom_call.1} parent=0 // loop_header_branch
    %11 = sbr.rel (%p9) target = $region8
  $region5: #{tpu_custom_call.1} parent=0 // loop_body
    %s13 = ssub.s32 %s8, 1
    %s14 = ssub.s32 %s8, 2
    %s21 = sadd.s32 1, %s16
    %p22 = scmp.ge.s32.totalorder %s21, 1
    %s23 = scalar_select %p22, 0, %s21
    %s24 = sadd.s32 1, %s15
    %s25 = scalar_select %p22, %s24, %s15
    %p26 = scmp.ge.s32.totalorder %s25, 2
    %s27 = scalar_select %p26, 0, %s25
    %s28 = ssub.s32 %s15, %s27
    %s29 = ssub.s32 %s16, %s23
    %s30 = sor.u32 %s28, %s29
    %p31 = scmp.eq.s32.totalorder %s30, 0
    %s33 = sadd.s32 %s32, 1
    %s34 = scalar_select %p31, %s32, %s33
    %p37 = pneg %p31
    %p38 = scmp.eq.s32.totalorder %s8, 1
    %p39 = por %p37, %p38
    %p40 = scmp.ne.s32.totalorder %s32, %s35
    %p41 = scmp.eq.s32.totalorder %s8, 0
    %p42 = por %p40, %p41
    %p43 = scmp.ne.s32.totalorder %s32, %s35
    %p44 = scmp.eq.s32.totalorder %s13, 1
    %p45 = por %p43, %p44
    %p46 = scmp.ne.s32.totalorder %s35, %s36
    %p47 = scmp.eq.s32.totalorder %s13, 0
    %p48 = por %p46, %p47
    %p49 = scmp.ne.s32.totalorder %s35, %s36
    %p50 = scmp.eq.s32.totalorder %s14, 1
    %p51 = por %p49, %p50
    %p53 = scmp.ne.s32.totalorder %s36, %s52
    %p54 = scmp.eq.s32.totalorder %s14, 0
    %p55 = por %p53, %p54
    %s56 = ssub.s32 %s16, %s23
    %p57 = scmp.eq.s32.totalorder %s56, 0
    %s59 = sadd.s32 %s58, 1
    %s60 = scalar_select %p57, %s58, %s59
    %p63 = pneg %p57
    %p64 = scmp.eq.s32.totalorder %s8, 1
    %p65 = por %p63, %p64
    %p66 = scmp.ne.s32.totalorder %s58, %s61
    %p67 = scmp.eq.s32.totalorder %s8, 0
    %p68 = por %p66, %p67
    %p69 = scmp.ne.s32.totalorder %s58, %s61
    %p70 = scmp.eq.s32.totalorder %s13, 1
    %p71 = por %p69, %p70
    %p72 = scmp.ne.s32.totalorder %s61, %s62
    %p73 = scmp.eq.s32.totalorder %s13, 0
    %p74 = por %p72, %p73
    %p75 = scmp.ne.s32.totalorder %s61, %s62
    %p76 = scmp.eq.s32.totalorder %s14, 1
    %p77 = por %p75, %p76
    %p79 = scmp.ne.s32.totalorder %s62, %s78
    %p80 = scmp.eq.s32.totalorder %s14, 0
    %p81 = por %p79, %p80
    %s82 = ssub.s32 %s15, %s27
    %p83 = scmp.eq.s32.totalorder %s82, 0
    %s85 = sadd.s32 %s84, 1
    %s86 = scalar_select %p83, %s84, %s85
    %p89 = pneg %p83
    %p90 = scmp.eq.s32.totalorder %s8, 1
    %p91 = por %p89, %p90
    %p92 = scmp.ne.s32.totalorder %s84, %s87
    %p93 = scmp.eq.s32.totalorder %s8, 0
    %p94 = por %p92, %p93
    %p95 = scmp.ne.s32.totalorder %s84, %s87
    %p96 = scmp.eq.s32.totalorder %s13, 1
    %p97 = por %p95, %p96
    %p98 = scmp.ne.s32.totalorder %s87, %s88
    %p99 = scmp.eq.s32.totalorder %s13, 0
    %p100 = por %p98, %p99
    %p101 = scmp.ne.s32.totalorder %s87, %s88
    %p102 = scmp.eq.s32.totalorder %s14, 1
    %p103 = por %p101, %p102
    %p105 = scmp.ne.s32.totalorder %s88, %s104
    %p106 = scmp.eq.s32.totalorder %s14, 0
    %p107 = por %p105, %p106
    %p108 = scmp.le.s32.totalorder 1, %s8
    %p109 = scmp.lt.s32.totalorder %s8, 3
    %p110 = pnand %p108, %p109
    %p111 = pneg %p110
    // Predicated region
    $region9: #{tpu_custom_call.1} parent=5 // pred_check
      _
    $region10: #{tpu_custom_call.1} parent=5 // pred_check_branch
      %113 = sbr.rel (%p110) target = $region12
    $region11: #{tpu_custom_call.1} parent=5 // pred_region
      %s114 = ssub.s32 %s8, 1
      // Predicated region
      $region13: #{tpu_custom_call.1} parent=11 // pred_check
        %p115 = pneg %p74
      $region14: #{tpu_custom_call.1} parent=11 // pred_check_branch
        %117 = sbr.rel (%p115) target = $region16
      $region15: #{tpu_custom_call.1} parent=11 // pred_region
        %s118 = smul.u32 4, %s18
        %p119 = scmp.lt.s32.totalorder %s118, 3
        %s120 = scalar_select %p119, %s118, 3
        %s121 = smul.addr %s120, 8
        %s122 = scalar_lea.vmem %s1, %s121
        %s123 = smul.u32 4, %s18
      $region16: #{tpu_custom_call.1} parent=11 // pred_fallthru
        _
    $region12: #{tpu_custom_call.1} parent=5 // pred_fallthru
      _
    %p124 = scmp.lt.s32.totalorder %s8, 2
    // Predicated region
    $region17: #{tpu_custom_call.1} parent=5 // pred_check
      %p125 = pneg %p124
    $region18: #{tpu_custom_call.1} parent=5 // pred_check_branch
      %127 = sbr.rel (%p125) target = $region20
    $region19: #{tpu_custom_call.1} parent=5 // pred_region
      // Predicated region
      $region21: #{tpu_custom_call.1} parent=19 // pred_check
        %p128 = pneg %p42
      $region22: #{tpu_custom_call.1} parent=19 // pred_check_branch
        %130 = sbr.rel (%p128) target = $region24
      $region23: #{tpu_custom_call.1} parent=19 // pred_region
        %p131 = scmp.lt.s32.totalorder %s15, 1
        %s132 = scalar_select %p131, %s15, 1
        %p133 = scmp.lt.s32.totalorder %s16, 0
        %s134 = scalar_select %p133, %s16, 0
        %s135 = sadd.s32 %s134, %s132
        %s136 = smul.addr %s135, 8
        %s137 = scalar_lea.vmem %s0, %s136
      $region24: #{tpu_custom_call.1} parent=19 // pred_fallthru
        _
    $region20: #{tpu_custom_call.1} parent=5 // pred_fallthru
      _
    %p138 = scmp.le.s32.totalorder 1, %s8
    %p139 = scmp.lt.s32.totalorder %s8, 3
    %p140 = pnand %p138, %p139
    %p141 = pneg %p140
    // Predicated region
    $region25: #{tpu_custom_call.1} parent=5 // pred_check
      _
    $region26: #{tpu_custom_call.1} parent=5 // pred_check_branch
      %143 = sbr.rel (%p140) target = $region28
    $region27: #{tpu_custom_call.1} parent=5 // pred_region
      %s144 = ssub.s32 %s8, 1
      %p145 = scmp.lt.s32.totalorder %s17, 1
      %s146 = scalar_select %p145, %s17, 1
      %p147 = scmp.lt.s32.totalorder %s18, 0
      %s148 = scalar_select %p147, %s18, 0
      %s149 = sadd.s32 %s148, %s146
      %s150 = smul.addr %s149, 8
      %s151 = scalar_lea.vmem %s0, %s150
      %p152 = pneg %p48
      %p153 = pneg %p45
      %s154 = smul.u32 4, %s18
      %p155 = scmp.lt.s32.totalorder %s154, 3
      %s156 = scalar_select %p155, %s154, 3
      %s157 = smul.addr %s156, 8
      %s158 = scalar_lea.vmem %s1, %s157
      %p159 = pneg %p74
      %p160 = pneg %p71
      %p161 = pneg %p100
      %p162 = pneg %p97
      %p163 = scmp.lt.s32.totalorder %s17, 1
      %s164 = scalar_select %p163, %s17, 1
      %s165 = smul.addr %s164, 8
      %s166 = scalar_lea.vmem %s2, %s165
      %p167 = scmp.lt.s32.totalorder %s17, 1
      %s168 = scalar_select %p167, %s17, 1
      %p169 = scmp.lt.s32.totalorder %s18, 0
      %s170 = scalar_select %p169, %s18, 0
      %s171 = sadd.s32 %s170, %s168
      %s172 = smul.addr %s171, 8
      %s173 = scalar_lea.vmem %s0, %s172
      %s174 = smul.u32 4, %s18
      %p175 = scmp.lt.s32.totalorder %s174, 3
      %s176 = scalar_select %p175, %s174, 3
      %s177 = smul.addr %s176, 8
      %s178 = scalar_lea.vmem %s1, %s177
      %s179 = smul.u32 4, %s18
      %p180 = scmp.lt.s32.totalorder %s17, 1
      %s181 = scalar_select %p180, %s17, 1
      %s182 = smul.addr %s181, 8
      %s183 = scalar_lea.vmem %s2, %s182
      %p184 = scmp.eq.s32.totalorder %s18, 0
      // Predicated region
      $region29: #{tpu_custom_call.1} parent=27 // pred_check
        %p185 = pneg %p184
      $region30: #{tpu_custom_call.1} parent=27 // pred_check_branch
        %187 = sbr.rel (%p185) target = $region32
      $region31: #{tpu_custom_call.1} parent=27 // pred_region
        %vm188 = vcmask 7168
        %189 = vst.msk [vmem:[#allocation2] sm:$0xff] %vm188, 0.0
      $region32: #{tpu_custom_call.1} parent=27 // pred_fallthru
        _
      %v190 = vld [vmem:[#allocation2] sm:$0xff]
      %v191 = vld [vmem:[%s173] sm:$0xff]
      %v192 = vld [vmem:[%s178] sm:$0xff]
      %v193 = vld [vmem:[%s178 + $0x8] sm:$0xff]
      %v194 = vld [vmem:[%s178 + $0x10] sm:$0xff]
      %v195 = vld [vmem:[%s178 + $0x18] sm:$0xff]
      %vm196 = vcmask 261120
      %v198 = vsel %vm196, %v191, 0
      %200 = vmatprep.subr.mxu0 0.0
      %201 = vmatpush1.msra.mxu0 %v192
      %202 = vmatprep.subr.mxu0 0.0
      %203 = vmatpush1.msra.mxu0 %v193
      %204 = vmatprep.subr.mxu0 0.0
      %205 = vmatpush1.msra.mxu0 %v194
      %206 = vmatprep.subr.mxu0 0.0
      %207 = vmatpush1.msra.mxu0 %v195
      %208 = vmatprep.subr.mxu0 0.0
      %209 = vmatpush1.msra.mxu0 0.0
      %210 = vmatprep.subr.mxu0 0.0
      %211 = vmatpush1.msra.mxu0 0.0
      %212 = vmatprep.subr.mxu0 0.0
      %213 = vmatpush1.msra.mxu0 0.0
      %214 = vmatprep.subr.mxu0 0.0
      %215 = vmatpush1.msra.mxu0 0.0
      %216 = vmatprep.subr.mxu0 0.0
      %217 = vmatpush1.msra.mxu0 0.0
      %218 = vmatprep.subr.mxu0 0.0
      %219 = vmatpush1.msra.mxu0 0.0
      %220 = vmatprep.subr.mxu0 0.0
      %221 = vmatpush1.msra.mxu0 0.0
      %222 = vmatprep.subr.mxu0 0.0
      %223 = vmatpush1.msra.mxu0 0.0
      %224 = vmatprep.subr.mxu0 0.0
      %225 = vmatpush1.msra.mxu0 0.0
      %226 = vmatprep.subr.mxu0 0.0
      %227 = vmatpush1.msra.mxu0 0.0
      %228 = vmatprep.subr.mxu0 0.0
      %229 = vmatpush1.msra.mxu0 0.0
      %230 = vmatprep.subr.mxu0 0.0
      %231 = vmatpush1.msra.mxu0 0.0
      %232 = vmatprep.subr.mxu0 0.0
      %233 = vmatpush1.msra.mxu0 0.0
      %234 = vmatprep.subr.mxu0 0.0
      %235 = vmatpush1.msra.mxu0 0.0
      %236 = vmatprep.subr.mxu0 0.0
      %237 = vmatpush1.msra.mxu0 0.0
      %238 = vmatprep.subr.mxu0 0.0
      %239 = vmatpush1.msra.mxu0 0.0
      %240 = vmatprep.subr.mxu0 0.0
      %241 = vmatpush1.msra.mxu0 0.0
      %242 = vmatprep.subr.mxu0 0.0
      %243 = vmatpush1.msra.mxu0 0.0
      %244 = vmatprep.subr.mxu0 0.0
      %245 = vmatpush1.msra.mxu0 0.0
      %246 = vmatprep.subr.mxu0 0.0
      %247 = vmatpush1.msra.mxu0 0.0
      %248 = vmatprep.subr.mxu0 0.0
      %249 = vmatpush1.msra.mxu0 0.0
      %250 = vmatprep.subr.mxu0 0.0
      %251 = vmatpush1.msra.mxu0 0.0
      %252 = vmatprep.subr.mxu0 0.0
      %253 = vmatpush1.msra.mxu0 0.0
      %254 = vmatprep.subr.mxu0 0.0
      %255 = vmatpush1.msra.mxu0 0.0
      %256 = vmatprep.subr.mxu0 0.0
      %257 = vmatpush1.msra.mxu0 0.0
      %258 = vmatprep.subr.mxu0 0.0
      %259 = vmatpush1.msra.mxu0 0.0
      %260 = vmatprep.subr.mxu0 0.0
      %261 = vmatpush1.msra.mxu0 0.0
      %262 = vmatprep.subr.mxu0 0.0
      %263 = vmatpush1.msra.mxu0 0.0
      %264 = vmatprep.mubr.f32.mxu0 0.0
      %265 = vmatmul.mubr.f32.gmra.mrb[0].mxu0 %v198
      %v266 = vpop.f32.mrb[0].mxu0
      %v267 = vadd.f32 0.0, %v266
      %v268 = vpop.f32.mrb[0].mxu0
      %269 = vdwg.mxu0
      %v270 = vadd.f32 %v190, %v267
      %vm271 = vcmask 7168
      %272 = vst.msk [vmem:[#allocation2] sm:$0xff] %vm271, %v270
      // Predicated region
      $region33: #{tpu_custom_call.1} parent=27 // pred_check
        %p273 = pneg %p184
      $region34: #{tpu_custom_call.1} parent=27 // pred_check_branch
        %275 = sbr.rel (%p273) target = $region36
      $region35: #{tpu_custom_call.1} parent=27 // pred_region
        %v276 = vld [vmem:[#allocation2] sm:$0xff]
        %v277 = vxor.u32 %v276, 2147483648
        %v278 = vmul.f32 %v277, 1.442695
        %v279 = vpow.pop %v278
        %v280 = vadd.f32 %v279, 1.0
        %v281 = vrcp.pop %v280
        %v282 = vmul.f32 1.0, %v281
        %283 = vst.msk [vmem:[%s183] sm:$0xff] %vm271, %v282
      $region36: #{tpu_custom_call.1} parent=27 // pred_fallthru
        _
      %p284 = scmp.lt.s32.totalorder %s17, 1
      %s285 = scalar_select %p284, %s17, 1
      %s286 = smul.addr %s285, 8
      %s287 = scalar_lea.vmem %s2, %s286
      // Predicated region
      $region37: #{tpu_custom_call.1} parent=27 // pred_check
        %p288 = pneg %p97
      $region38: #{tpu_custom_call.1} parent=27 // pred_check_branch
        %290 = sbr.rel (%p288) target = $region40
      $region39: #{tpu_custom_call.1} parent=27 // pred_region
        _
      $region40: #{tpu_custom_call.1} parent=27 // pred_fallthru
        _
    $region28: #{tpu_custom_call.1} parent=5 // pred_fallthru
      _
    %p291 = scmp.le.s32.totalorder 2, %s8
    // Predicated region
    $region41: #{tpu_custom_call.1} parent=5 // pred_check
      %p292 = pneg %p291
    $region42: #{tpu_custom_call.1} parent=5 // pred_check_branch
      %294 = sbr.rel (%p292) target = $region44
    $region43: #{tpu_custom_call.1} parent=5 // pred_region
      %s295 = ssub.s32 %s8, 2
      // Predicated region
      $region45: #{tpu_custom_call.1} parent=43 // pred_check
        %p296 = pneg %p103
      $region46: #{tpu_custom_call.1} parent=43 // pred_check_branch
        %298 = sbr.rel (%p296) target = $region48
      $region47: #{tpu_custom_call.1} parent=43 // pred_region
        %p299 = scmp.lt.s32.totalorder %s19, 1
        %s300 = scalar_select %p299, %s19, 1
        %s301 = smul.addr %s300, 8
        %s302 = scalar_lea.vmem %s2, %s301
      $region48: #{tpu_custom_call.1} parent=43 // pred_fallthru
        _
    $region44: #{tpu_custom_call.1} parent=5 // pred_fallthru
      _
  $region6: #{tpu_custom_call.1} parent=0 // loop_footer
    %s12 = sadd.s32 1, %s8
  $region7: #{tpu_custom_call.1} parent=0 // loop_footer_branch
    %7 = sbr.rel target = $region3
  $region8: #{tpu_custom_call.1} parent=0 // loop_exit
    _

// kernel: tpu_custom_call.1
$region0: #{tpu_custom_call.1}
  #allocation0 [shape = 'u32[]', space=smem, size = 0x4, offset = 0x4, fixed_abs, tag = 'smem constant byte address 0x4 - core index']
  #allocation1 [shape = 'u32[144,128]{1,0:T(1,128)}', space=vmem, size = 0x12000, scoped, tag = 'internal scratch']
  #allocation2 [shape = 'f32[8,1]{1,0:T(8,128)}', space=vmem, size = 0x1000, scoped, tag = 'scratch operand']
  %s0 = inlined_call_operand.vmem [shape: f32[16,32], index: 0, kind: input, shape index: {}]
  %s1 = inlined_call_operand.vmem [shape: f32[32,1], index: 1, kind: input, shape index: {}]
  %s2 = inlined_call_operand.vmem [shape: f32[16,1], index: 2, kind: output, shape index: {}]
  %s3 = sld [smem:[#allocation0]]
  $region49: #{tpu_custom_call.1} parent=0
    _
  %s5 = ssub.s32 1, %s3
  %s6 = scalar_select 0, %s5, %s3
  loop: start=0, step=1, limit=4
  $region2: #{tpu_custom_call.1} parent=0 // loop_pre_header
    _
  $region3: #{tpu_custom_call.1} parent=0 // loop_header
    %s8 = sphi 0, %s12
    %p9 = scmp.ge.s32.totalorder %s8, 4
    %s15 = sphi 0, %s27
    %s16 = sphi 0, %s23
    %s17 = sphi 0, %s15
    %s18 = sphi 0, %s16
    %s19 = sphi 0, %s17
    %s20 = sphi 0, %s18
    %s32 = sphi 0, %s34
    %s35 = sphi 0, %s32
    %s36 = sphi 0, %s35
    %s52 = sphi 0, %s36
    %s58 = sphi 0, %s60
    %s61 = sphi 0, %s58
    %s62 = sphi 0, %s61
    %s78 = sphi 0, %s62
    %s84 = sphi 0, %s86
    %s87 = sphi 0, %s84
    %s88 = sphi 0, %s87
    %s104 = sphi 0, %s88
  $region4: #{tpu_custom_call.1} parent=0 // loop_header_branch
    %11 = sbr.rel (%p9) target = $region8
  $region5: #{tpu_custom_call.1} parent=0 // loop_body
    %s13 = ssub.s32 %s8, 1
    %s14 = ssub.s32 %s8, 2
    %s21 = sadd.s32 1, %s16
    %p22 = scmp.ge.s32.totalorder %s21, 1
    %s23 = scalar_select %p22, 0, %s21
    %s24 = sadd.s32 1, %s15
    %s25 = scalar_select %p22, %s24, %s15
    %p26 = scmp.ge.s32.totalorder %s25, 2
    %s27 = scalar_select %p26, 0, %s25
    %s28 = ssub.s32 %s15, %s27
    %s29 = ssub.s32 %s16, %s23
    %s30 = sor.u32 %s28, %s29
    %p31 = scmp.eq.s32.totalorder %s30, 0
    %s33 = sadd.s32 %s32, 1
    %s34 = scalar_select %p31, %s32, %s33
    %p37 = pneg %p31
    %p38 = scmp.eq.s32.totalorder %s8, 1
    %p39 = por %p37, %p38
    %p40 = scmp.ne.s32.totalorder %s32, %s35
    %p41 = scmp.eq.s32.totalorder %s8, 0
    %p42 = por %p40, %p41
    %p43 = scmp.ne.s32.totalorder %s32, %s35
    %p44 = scmp.eq.s32.totalorder %s13, 1
    %p45 = por %p43, %p44
    %p46 = scmp.ne.s32.totalorder %s35, %s36
    %p47 = scmp.eq.s32.totalorder %s13, 0
    %p48 = por %p46, %p47
    %p49 = scmp.ne.s32.totalorder %s35, %s36
    %p50 = scmp.eq.s32.totalorder %s14, 1
    %p51 = por %p49, %p50
    %p53 = scmp.ne.s32.totalorder %s36, %s52
    %p54 = scmp.eq.s32.totalorder %s14, 0
    %p55 = por %p53, %p54
    %s56 = ssub.s32 %s16, %s23
    %p57 = scmp.eq.s32.totalorder %s56, 0
    %s59 = sadd.s32 %s58, 1
    %s60 = scalar_select %p57, %s58, %s59
    %p63 = pneg %p57
    %p64 = scmp.eq.s32.totalorder %s8, 1
    %p65 = por %p63, %p64
    %p66 = scmp.ne.s32.totalorder %s58, %s61
    %p67 = scmp.eq.s32.totalorder %s8, 0
    %p68 = por %p66, %p67
    %p69 = scmp.ne.s32.totalorder %s58, %s61
    %p70 = scmp.eq.s32.totalorder %s13, 1
    %p71 = por %p69, %p70
    %p72 = scmp.ne.s32.totalorder %s61, %s62
    %p73 = scmp.eq.s32.totalorder %s13, 0
    %p74 = por %p72, %p73
    %p75 = scmp.ne.s32.totalorder %s61, %s62
    %p76 = scmp.eq.s32.totalorder %s14, 1
    %p77 = por %p75, %p76
    %p79 = scmp.ne.s32.totalorder %s62, %s78
    %p80 = scmp.eq.s32.totalorder %s14, 0
    %p81 = por %p79, %p80
    %s82 = ssub.s32 %s15, %s27
    %p83 = scmp.eq.s32.totalorder %s82, 0
    %s85 = sadd.s32 %s84, 1
    %s86 = scalar_select %p83, %s84, %s85
    %p89 = pneg %p83
    %p90 = scmp.eq.s32.totalorder %s8, 1
    %p91 = por %p89, %p90
    %p92 = scmp.ne.s32.totalorder %s84, %s87
    %p93 = scmp.eq.s32.totalorder %s8, 0
    %p94 = por %p92, %p93
    %p95 = scmp.ne.s32.totalorder %s84, %s87
    %p96 = scmp.eq.s32.totalorder %s13, 1
    %p97 = por %p95, %p96
    %p98 = scmp.ne.s32.totalorder %s87, %s88
    %p99 = scmp.eq.s32.totalorder %s13, 0
    %p100 = por %p98, %p99
    %p101 = scmp.ne.s32.totalorder %s87, %s88
    %p102 = scmp.eq.s32.totalorder %s14, 1
    %p103 = por %p101, %p102
    %p105 = scmp.ne.s32.totalorder %s88, %s104
    %p106 = scmp.eq.s32.totalorder %s14, 0
    %p107 = por %p105, %p106
    %p108 = scmp.le.s32.totalorder 1, %s8
    %p109 = scmp.lt.s32.totalorder %s8, 3
    %p110 = pnand %p108, %p109
    %p111 = pneg %p110
    // Predicated region
    $region9: #{tpu_custom_call.1} parent=5 // pred_check
      _
    $region10: #{tpu_custom_call.1} parent=5 // pred_check_branch
      %113 = sbr.rel (%p110) target = $region12
    $region11: #{tpu_custom_call.1} parent=5 // pred_region
      %s114 = ssub.s32 %s8, 1
      // Predicated region
      $region13: #{tpu_custom_call.1} parent=11 // pred_check
        %p115 = pneg %p74
      $region14: #{tpu_custom_call.1} parent=11 // pred_check_branch
        %117 = sbr.rel (%p115) target = $region16
      $region15: #{tpu_custom_call.1} parent=11 // pred_region
        %s118 = smul.u32 4, %s18
        %p119 = scmp.lt.s32.totalorder %s118, 3
        %s120 = scalar_select %p119, %s118, 3
        %s121 = smul.addr %s120, 8
        %s122 = scalar_lea.vmem %s1, %s121
        %s123 = smul.u32 4, %s18
      $region16: #{tpu_custom_call.1} parent=11 // pred_fallthru
        _
    $region12: #{tpu_custom_call.1} parent=5 // pred_fallthru
      _
    %p124 = scmp.lt.s32.totalorder %s8, 2
    // Predicated region
    $region17: #{tpu_custom_call.1} parent=5 // pred_check
      %p125 = pneg %p124
    $region18: #{tpu_custom_call.1} parent=5 // pred_check_branch
      %127 = sbr.rel (%p125) target = $region20
    $region19: #{tpu_custom_call.1} parent=5 // pred_region
      // Predicated region
      $region21: #{tpu_custom_call.1} parent=19 // pred_check
        %p128 = pneg %p42
      $region22: #{tpu_custom_call.1} parent=19 // pred_check_branch
        %130 = sbr.rel (%p128) target = $region24
      $region23: #{tpu_custom_call.1} parent=19 // pred_region
        %p131 = scmp.lt.s32.totalorder %s15, 1
        %s132 = scalar_select %p131, %s15, 1
        %p133 = scmp.lt.s32.totalorder %s16, 0
        %s134 = scalar_select %p133, %s16, 0
        %s135 = sadd.s32 %s134, %s132
        %s136 = smul.addr %s135, 8
        %s137 = scalar_lea.vmem %s0, %s136
      $region24: #{tpu_custom_call.1} parent=19 // pred_fallthru
        _
    $region20: #{tpu_custom_call.1} parent=5 // pred_fallthru
      _
    %p138 = scmp.le.s32.totalorder 1, %s8
    %p139 = scmp.lt.s32.totalorder %s8, 3
    %p140 = pnand %p138, %p139
    %p141 = pneg %p140
    // Predicated region
    $region25: #{tpu_custom_call.1} parent=5 // pred_check
      _
    $region26: #{tpu_custom_call.1} parent=5 // pred_check_branch
      %143 = sbr.rel (%p140) target = $region28
    $region27: #{tpu_custom_call.1} parent=5 // pred_region
      %s144 = ssub.s32 %s8, 1
      %p145 = scmp.lt.s32.totalorder %s17, 1
      %s146 = scalar_select %p145, %s17, 1
      %p147 = scmp.lt.s32.totalorder %s18, 0
      %s148 = scalar_select %p147, %s18, 0
      %s149 = sadd.s32 %s148, %s146
      %s150 = smul.addr %s149, 8
      %s151 = scalar_lea.vmem %s0, %s150
      %p152 = pneg %p48
      %p153 = pneg %p45
      %s154 = smul.u32 4, %s18
      %p155 = scmp.lt.s32.totalorder %s154, 3
      %s156 = scalar_select %p155, %s154, 3
      %s157 = smul.addr %s156, 8
      %s158 = scalar_lea.vmem %s1, %s157
      %p159 = pneg %p74
      %p160 = pneg %p71
      %p161 = pneg %p100
      %p162 = pneg %p97
      %p163 = scmp.lt.s32.totalorder %s17, 1
      %s164 = scalar_select %p163, %s17, 1
      %s165 = smul.addr %s164, 8
      %s166 = scalar_lea.vmem %s2, %s165
      %p167 = scmp.lt.s32.totalorder %s17, 1
      %s168 = scalar_select %p167, %s17, 1
      %p169 = scmp.lt.s32.totalorder %s18, 0
      %s170 = scalar_select %p169, %s18, 0
      %s171 = sadd.s32 %s170, %s168
      %s172 = smul.addr %s171, 8
      %s173 = scalar_lea.vmem %s0, %s172
      %s174 = smul.u32 4, %s18
      %p175 = scmp.lt.s32.totalorder %s174, 3
      %s176 = scalar_select %p175, %s174, 3
      %s177 = smul.addr %s176, 8
      %s178 = scalar_lea.vmem %s1, %s177
      %s179 = smul.u32 4, %s18
      %p180 = scmp.lt.s32.totalorder %s17, 1
      %s181 = scalar_select %p180, %s17, 1
      %s182 = smul.addr %s181, 8
      %s183 = scalar_lea.vmem %s2, %s182
      %p184 = scmp.eq.s32.totalorder %s18, 0
      // Predicated region
      $region29: #{tpu_custom_call.1} parent=27 // pred_check
        %p185 = pneg %p184
      $region30: #{tpu_custom_call.1} parent=27 // pred_check_branch
        %187 = sbr.rel (%p185) target = $region32
      $region31: #{tpu_custom_call.1} parent=27 // pred_region
        %vm188 = vcmask 7168
        %189 = vst.msk [vmem:[#allocation2] sm:$0xff] %vm188, 0.0
      $region32: #{tpu_custom_call.1} parent=27 // pred_fallthru
        _
      %v190 = vld [vmem:[#allocation2] sm:$0xff]
      %v191 = vld [vmem:[%s173] sm:$0xff]
      %v192 = vld [vmem:[%s178] sm:$0xff]
      %v193 = vld [vmem:[%s178 + $0x8] sm:$0xff]
      %v194 = vld [vmem:[%s178 + $0x10] sm:$0xff]
      %v195 = vld [vmem:[%s178 + $0x18] sm:$0xff]
      %vm196 = vcmask 261120
      %v198 = vsel %vm196, %v191, 0
      %200 = vmatprep.subr.mxu0 0.0
      %201 = vmatpush1.msra.mxu0 %v192
      %202 = vmatprep.subr.mxu0 0.0
      %203 = vmatpush1.msra.mxu0 %v193
      %204 = vmatprep.subr.mxu0 0.0
      %205 = vmatpush1.msra.mxu0 %v194
      %206 = vmatprep.subr.mxu0 0.0
      %207 = vmatpush1.msra.mxu0 %v195
      %208 = vmatprep.subr.mxu0 0.0
      %209 = vmatpush1.msra.mxu0 0.0
      %210 = vmatprep.subr.mxu0 0.0
      %211 = vmatpush1.msra.mxu0 0.0
      %212 = vmatprep.subr.mxu0 0.0
      %213 = vmatpush1.msra.mxu0 0.0
      %214 = vmatprep.subr.mxu0 0.0
      %215 = vmatpush1.msra.mxu0 0.0
      %216 = vmatprep.subr.mxu0 0.0
      %217 = vmatpush1.msra.mxu0 0.0
      %218 = vmatprep.subr.mxu0 0.0
      %219 = vmatpush1.msra.mxu0 0.0
      %220 = vmatprep.subr.mxu0 0.0
      %221 = vmatpush1.msra.mxu0 0.0
      %222 = vmatprep.subr.mxu0 0.0
      %223 = vmatpush1.msra.mxu0 0.0
      %224 = vmatprep.subr.mxu0 0.0
      %225 = vmatpush1.msra.mxu0 0.0
      %226 = vmatprep.subr.mxu0 0.0
      %227 = vmatpush1.msra.mxu0 0.0
      %228 = vmatprep.subr.mxu0 0.0
      %229 = vmatpush1.msra.mxu0 0.0
      %230 = vmatprep.subr.mxu0 0.0
      %231 = vmatpush1.msra.mxu0 0.0
      %232 = vmatprep.subr.mxu0 0.0
      %233 = vmatpush1.msra.mxu0 0.0
      %234 = vmatprep.subr.mxu0 0.0
      %235 = vmatpush1.msra.mxu0 0.0
      %236 = vmatprep.subr.mxu0 0.0
      %237 = vmatpush1.msra.mxu0 0.0
      %238 = vmatprep.subr.mxu0 0.0
      %239 = vmatpush1.msra.mxu0 0.0
      %240 = vmatprep.subr.mxu0 0.0
      %241 = vmatpush1.msra.mxu0 0.0
      %242 = vmatprep.subr.mxu0 0.0
      %243 = vmatpush1.msra.mxu0 0.0
      %244 = vmatprep.subr.mxu0 0.0
      %245 = vmatpush1.msra.mxu0 0.0
      %246 = vmatprep.subr.mxu0 0.0
      %247 = vmatpush1.msra.mxu0 0.0
      %248 = vmatprep.subr.mxu0 0.0
      %249 = vmatpush1.msra.mxu0 0.0
      %250 = vmatprep.subr.mxu0 0.0
      %251 = vmatpush1.msra.mxu0 0.0
      %252 = vmatprep.subr.mxu0 0.0
      %253 = vmatpush1.msra.mxu0 0.0
      %254 = vmatprep.subr.mxu0 0.0
      %255 = vmatpush1.msra.mxu0 0.0
      %256 = vmatprep.subr.mxu0 0.0
      %257 = vmatpush1.msra.mxu0 0.0
      %258 = vmatprep.subr.mxu0 0.0
      %259 = vmatpush1.msra.mxu0 0.0
      %260 = vmatprep.subr.mxu0 0.0
      %261 = vmatpush1.msra.mxu0 0.0
      %262 = vmatprep.subr.mxu0 0.0
      %263 = vmatpush1.msra.mxu0 0.0
      %264 = vmatprep.mubr.f32.mxu0 0.0
      %265 = vmatmul.mubr.f32.gmra.mrb[0].mxu0 %v198
      %v266 = vpop.f32.mrb[0].mxu0
      %v267 = vadd.f32 0.0, %v266
      %v268 = vpop.f32.mrb[0].mxu0
      %269 = vdwg.mxu0
      %v270 = vadd.f32 %v190, %v267
      %vm271 = vcmask 7168
      %272 = vst.msk [vmem:[#allocation2] sm:$0xff] %vm271, %v270
      // Predicated region
      $region33: #{tpu_custom_call.1} parent=27 // pred_check
        %p273 = pneg %p184
      $region34: #{tpu_custom_call.1} parent=27 // pred_check_branch
        %275 = sbr.rel (%p273) target = $region36
      $region35: #{tpu_custom_call.1} parent=27 // pred_region
        %v276 = vld [vmem:[#allocation2] sm:$0xff]
        %v277 = vxor.u32 %v276, 2147483648
        %v278 = vmul.f32 %v277, 1.442695
        %v279 = vpow.pop %v278
        %v280 = vadd.f32 %v279, 1.0
        %v281 = vrcp.pop %v280
        %v282 = vmul.f32 1.0, %v281
        %283 = vst.msk [vmem:[%s183] sm:$0xff] %vm271, %v282
      $region36: #{tpu_custom_call.1} parent=27 // pred_fallthru
        _
      %p284 = scmp.lt.s32.totalorder %s17, 1
      %s285 = scalar_select %p284, %s17, 1
      %s286 = smul.addr %s285, 8
      %s287 = scalar_lea.vmem %s2, %s286
      // Predicated region
      $region37: #{tpu_custom_call.1} parent=27 // pred_check
        %p288 = pneg %p97
      $region38: #{tpu_custom_call.1} parent=27 // pred_check_branch
        %290 = sbr.rel (%p288) target = $region40
      $region39: #{tpu_custom_call.1} parent=27 // pred_region
        _
      $region40: #{tpu_custom_call.1} parent=27 // pred_fallthru
        _
    $region28: #{tpu_custom_call.1} parent=5 // pred_fallthru
      _
    %p291 = scmp.le.s32.totalorder 2, %s8
    // Predicated region
    $region41: #{tpu_custom_call.1} parent=5 // pred_check
      %p292 = pneg %p291
    $region42: #{tpu_custom_call.1} parent=5 // pred_check_branch
      %294 = sbr.rel (%p292) target = $region44
    $region43: #{tpu_custom_call.1} parent=5 // pred_region
      %s295 = ssub.s32 %s8, 2
      // Predicated region
      $region45: #{tpu_custom_call.1} parent=43 // pred_check
        %p296 = pneg %p103
      $region46: #{tpu_custom_call.1} parent=43 // pred_check_branch
        %298 = sbr.rel (%p296) target = $region48
      $region47: #{tpu_custom_call.1} parent=43 // pred_region
        %p299 = scmp.lt.s32.totalorder %s19, 1
        %s300 = scalar_select %p299, %s19, 1
        %s301 = smul.addr %s300, 8
        %s302 = scalar_lea.vmem %s2, %s301
      $region48: #{tpu_custom_call.1} parent=43 // pred_fallthru
        _
    $region44: #{tpu_custom_call.1} parent=5 // pred_fallthru
      _
  $region6: #{tpu_custom_call.1} parent=0 // loop_footer
    %s12 = sadd.s32 1, %s8
  $region7: #{tpu_custom_call.1} parent=0 // loop_footer_branch
    %7 = sbr.rel target = $region3
  $region8: #{tpu_custom_call.1} parent=0 // loop_exit
    _

</llo_original>
